<compile_context>
chip_gen: v7x
topology: tpu7x:2x2x1
jax: 0.10.0
libtpu: 0.0.40
codegen_flags: <defaults>
</compile_context>

<pallas_src>
import functools

import jax
import jax.numpy as jnp
from jax.experimental import pallas as pl
from jax.experimental.pallas import tpu as pltpu

LANE = 128
SUBLANE = 8
MAX_ROW_TILE = 512           # sweep 512-1024; per-step overhead amortizes here
ACT_DTYPE = jnp.bfloat16     # streamed activations / resident weights


def _round_up(x, m):
    return ((x + m - 1) // m) * m


def _combiner_kernel(z_ref, h_ref, w_in_ref, w_out_ref, aux_ref, out_ref,
                     *, r_pad, out_pad):
    # aux rows: [alpha, 1 - alpha, b_in, b_out], f32, zero-padded to lane width.
    alpha = aux_ref[0:1, :r_pad]            # (1, Rp)
    one_minus_alpha = aux_ref[1:2, :r_pad]  # (1, Rp)
    b_in = aux_ref[2:3, :r_pad]             # (1, Rp)
    b_out = aux_ref[3:4, :out_pad]          # (1, Op)

    # Fused input Linears + tanh: (TILE_B, Zp) @ (Zp, Rp) — bf16 in, f32 accum.
    z_mapped = jnp.tanh(
        jnp.dot(z_ref[...], w_in_ref[...], preferred_element_type=jnp.float32)
        + b_in)

    # alpha-blend with the concatenated RNN hidden states (f32 VPU elementwise).
    combined = alpha * z_mapped + one_minus_alpha * h_ref[...].astype(jnp.float32)

    # Output Linear: (TILE_B, Rp) @ (Rp, Op); Op % 128 == 0 -> lane-dense store.
    out_ref[...] = (
        jnp.dot(combined.astype(w_out_ref.dtype), w_out_ref[...],
                preferred_element_type=jnp.float32)
        + b_out).astype(out_ref.dtype)


def pack_params(w_in_list, b_in_list, w_out, b_out, alphas):
    """One-time packing / padding of the module parameters for the kernel.

    w_in_list[i]: (z_dim, rnn_dim_i)   (transpose of torch nn.Linear .weight)
    b_in_list[i]: (rnn_dim_i,)
    w_out:        (sum(rnn_dims), output_dim)
    b_out:        (output_dim,)
    alphas[i]:    scalar blend factor for RNN i (alpha_init or alpha_run)
    """
    z_dim = w_in_list[0].shape[0]
    rnn_dims = [w.shape[1] for w in w_in_list]
    r_total = sum(rnn_dims)
    out_dim = w_out.shape[1]

    z_pad = _round_up(z_dim, SUBLANE)       # K dim: no 128 pad (MXU pads internally)
    r_pad = _round_up(r_total, LANE)
    out_pad = _round_up(out_dim, LANE)
    w_max = max(r_pad, out_pad)

    w_in = jnp.concatenate(w_in_list, axis=1).astype(jnp.float32)        # (z, R)
    b_in = jnp.concatenate([b.reshape(-1) for b in b_in_list]).astype(jnp.float32)
    alpha_vec = jnp.concatenate(
        [jnp.full((d,), a, dtype=jnp.float32) for d, a in zip(rnn_dims, alphas)])

    w_in_p = (jnp.zeros((z_pad, r_pad), jnp.float32)
              .at[:z_dim, :r_total].set(w_in)).astype(ACT_DTYPE)
    w_out_p = (jnp.zeros((r_pad, out_pad), jnp.float32)
               .at[:r_total, :out_dim].set(w_out.astype(jnp.float32))
               ).astype(ACT_DTYPE)

    aux = jnp.zeros((4, w_max), jnp.float32)
    aux = aux.at[0, :r_total].set(alpha_vec)
    aux = aux.at[1, :r_total].set(1.0 - alpha_vec)     # padded cols stay 0 -> exact zeros downstream
    aux = aux.at[2, :r_total].set(b_in)
    aux = aux.at[3, :out_dim].set(b_out.reshape(-1).astype(jnp.float32))

    meta = dict(z_dim=z_dim, z_pad=z_pad, r_total=r_total, r_pad=r_pad,
                out_dim=out_dim, out_pad=out_pad, w_max=w_max)
    return dict(w_in=w_in_p, w_out=w_out_p, aux=aux, meta=meta)


def _choose_rows_tiles(batch):
    """Pick (rows, tile_b, n_tiles) minimizing row padding (<8 rows per tile)
    while keeping >=2 tiles whenever possible so both v7x TensorCores get work."""
    rows8 = _round_up(max(batch, 1), SUBLANE)
    if rows8 <= SUBLANE:
        n_tiles = 1
    elif rows8 <= 2 * MAX_ROW_TILE:
        n_tiles = 2
    else:
        n_tiles = -(-rows8 // MAX_ROW_TILE)
    tile_b = _round_up(-(-rows8 // n_tiles), SUBLANE)
    return tile_b * n_tiles, tile_b, n_tiles


def dkf_combiner_linear(z_prev, rnn_hs, packed):
    """Runs the fused DKF_CombinerLinear forward on TPU via Pallas.

    z_prev: (B, z_dim) float32
    rnn_hs: list of (B, rnn_dim_i) float32
    packed: output of pack_params
    """
    meta = packed["meta"]
    z_dim, z_pad = meta["z_dim"], meta["z_pad"]
    r_total, r_pad = meta["r_total"], meta["r_pad"]
    out_dim, out_pad = meta["out_dim"], meta["out_pad"]
    w_max = meta["w_max"]
    B = z_prev.shape[0]

    rows, tile_b, n_tiles = _choose_rows_tiles(B)

    # z stream: single pad (rows + K alignment only); no 128-padding of K.
    zp = z_prev.astype(ACT_DTYPE)
    if rows != B or z_pad != z_dim:
        zp = jnp.pad(zp, ((0, rows - B), (0, z_pad - z_dim)))

    # h stream: one concat that also appends the zero lane-padding columns,
    # plus at most one row pad; skipped entirely when already aligned.
    h_parts = [h.astype(ACT_DTYPE) for h in rnn_hs]
    if r_pad != r_total:
        h_parts.append(jnp.zeros((B, r_pad - r_total), ACT_DTYPE))
    hp = h_parts[0] if len(h_parts) == 1 else jnp.concatenate(h_parts, axis=1)
    if rows != B:
        hp = jnp.pad(hp, ((0, rows - B), (0, 0)))
    # TODO(synk): pass rnn_hs as separate kernel inputs and blend per-segment
    # in-kernel to eliminate the host-side concat for very large B.

    kernel = functools.partial(_combiner_kernel, r_pad=r_pad, out_pad=out_pad)

    act_isz = jnp.dtype(ACT_DTYPE).itemsize
    flops = 2 * rows * (z_pad * r_pad + r_pad * out_pad)
    bytes_accessed = (rows * (z_pad + r_pad) * act_isz + rows * out_pad * 4
                      + (z_pad * r_pad + r_pad * out_pad) * act_isz
                      + 4 * w_max * 4)
    cost = pl.CostEstimate(flops=flops, transcendentals=rows * r_pad,
                           bytes_accessed=bytes_accessed)

    # Generous VMEM budget: double-buffered streams + (conservatively doubled)
    # resident parameters, floored at 16 MiB and capped below v7x's 64 MiB.
    vmem_est = (2 * (z_pad * r_pad + r_pad * out_pad) * act_isz
                + 2 * 8 * w_max * 4
                + 2 * tile_b * (z_pad + r_pad) * act_isz
                + 2 * tile_b * out_pad * 4)
    vmem_limit = int(min(max(2 * vmem_est, 16 << 20), 48 << 20))

    out_p = pl.pallas_call(
        kernel,
        out_shape=jax.ShapeDtypeStruct((rows, out_pad), jnp.float32),
        grid_spec=pltpu.PrefetchScalarGridSpec(
            num_scalar_prefetch=0,
            grid=(n_tiles,),
            in_specs=[
                # Activation streams: tiled along rows, pipelined across the grid.
                pl.BlockSpec((tile_b, z_pad), lambda i: (i, 0)),
                pl.BlockSpec((tile_b, r_pad), lambda i: (i, 0)),
                # Parameters: constant block index -> resident in VMEM.
                # TODO(synk): pipeline_mode=pl.Buffered(1) to single-buffer these
                # once rnn_dims/output_dim grow enough to pressure v7x's 64 MiB.
                pl.BlockSpec((z_pad, r_pad), lambda i: (0, 0)),
                pl.BlockSpec((r_pad, out_pad), lambda i: (0, 0)),
                pl.BlockSpec((4, w_max), lambda i: (0, 0)),
            ],
            out_specs=pl.BlockSpec((tile_b, out_pad), lambda i: (i, 0)),
        ),
        compiler_params=pltpu.CompilerParams(
            dimension_semantics=("parallel",),
            vmem_limit_bytes=vmem_limit),
        cost_estimate=cost,
    )(zp, hp, packed["w_in"], packed["w_out"], packed["aux"])

    return out_p[:B, :out_dim]


def reference_forward(z_prev, rnn_hs, w_in_list, b_in_list, w_out, b_out, alphas):
    """Pure-JAX f32 reference matching DKF_CombinerLinear.forward (tanh)."""
    combined = []
    for i, h in enumerate(rnn_hs):
        z_mapped = jnp.tanh(z_prev @ w_in_list[i] + b_in_list[i])
        combined.append(alphas[i] * z_mapped + (1.0 - alphas[i]) * h)
    combined = jnp.concatenate(combined, axis=1)
    return combined @ w_out + b_out


if __name__ == "__main__":
    # Small shapes consistent with the module's forward:
    #   z_prev: (B, z_dim), rnn_hs: [(B, rnn_dim0), (B, rnn_dim1)]
    B, z_dim = 8, 16
    rnn_dims = [32, 16]
    output_dim = 24
    alphas = [0.6, 0.3]      # alpha_init values used on the first forward pass

    key = jax.random.PRNGKey(0)
    ks = jax.random.split(key, 10)

    z_prev = jax.random.normal(ks[0], (B, z_dim), jnp.float32)
    rnn_hs = [jax.random.normal(ks[1], (B, rnn_dims[0]), jnp.float32),
              jax.random.normal(ks[2], (B, rnn_dims[1]), jnp.float32)]

    # Parameters stored as (in, out) = transpose of torch nn.Linear's (out, in).
    w_in_list = [jax.random.normal(ks[3], (z_dim, rnn_dims[0]), jnp.float32) * 0.1,
                 jax.random.normal(ks[4], (z_dim, rnn_dims[1]), jnp.float32) * 0.1]
    b_in_list = [jax.random.normal(ks[5], (rnn_dims[0],), jnp.float32) * 0.1,
                 jax.random.normal(ks[6], (rnn_dims[1],), jnp.float32) * 0.1]
    w_out = jax.random.normal(ks[7], (sum(rnn_dims), output_dim), jnp.float32) * 0.1
    b_out = jax.random.normal(ks[8], (output_dim,), jnp.float32) * 0.1

    packed = pack_params(w_in_list, b_in_list, w_out, b_out, alphas)

    out = dkf_combiner_linear(z_prev, rnn_hs, packed)
    out = jax.block_until_ready(out)

    ref = reference_forward(z_prev, rnn_hs, w_in_list, b_in_list, w_out, b_out, alphas)
    assert out.shape == (B, output_dim)
    # bf16 streams / weights with f32 accumulation -> relaxed tolerance vs f32 ref.
    max_err = float(jnp.max(jnp.abs(out - ref)))
    assert jnp.allclose(out, ref, atol=5e-2, rtol=5e-2), max_err

    print("KERNEL_OK")
</pallas_src>

<mosaic_0001>
module attributes {stable_mosaic.version = 11 : i64} {
  func.func @_combiner_kernel(%arg0: i32, %arg1: memref<8x16xbf16, #tpu.memory_space<vmem>>, %arg2: memref<8x128xbf16, #tpu.memory_space<vmem>>, %arg3: memref<16x128xbf16, #tpu.memory_space<vmem>>, %arg4: memref<128x128xbf16, #tpu.memory_space<vmem>>, %arg5: memref<4x128xf32, #tpu.memory_space<vmem>>, %arg6: memref<8x128xf32, #tpu.memory_space<vmem>>) attributes {dimension_semantics = [#tpu.dimension_semantics<parallel>], iteration_bounds = array<i64: 1>, scalar_prefetch = 0 : i64, scratch_operands = 0 : i64, tpu.core_type = #tpu.core_type<tc>, window_params = [{transform_indices = @transform_0, window_bounds = array<i64: 8, 16>}, {transform_indices = @transform_1, window_bounds = array<i64: 8, 128>}, {pipeline_mode = #tpu.pipeline_mode<synchronous>, transform_indices = @transform_2, window_bounds = array<i64: 16, 128>}, {pipeline_mode = #tpu.pipeline_mode<synchronous>, transform_indices = @transform_3, window_bounds = array<i64: 128, 128>}, {pipeline_mode = #tpu.pipeline_mode<synchronous>, transform_indices = @transform_4, window_bounds = array<i64: 4, 128>}, {transform_indices = @transform_5, window_bounds = array<i64: 8, 128>}]} {
    %c0 = arith.constant 0 : index
    %c0_0 = arith.constant 0 : index
    %0 = vector.load %arg5[%c0, %c0_0] : memref<4x128xf32, #tpu.memory_space<vmem>>, vector<1x128xf32>
    %c1 = arith.constant 1 : index
    %c0_1 = arith.constant 0 : index
    %1 = vector.load %arg5[%c1, %c0_1] : memref<4x128xf32, #tpu.memory_space<vmem>>, vector<1x128xf32>
    %c2 = arith.constant 2 : index
    %c0_2 = arith.constant 0 : index
    %2 = vector.load %arg5[%c2, %c0_2] : memref<4x128xf32, #tpu.memory_space<vmem>>, vector<1x128xf32>
    %c3 = arith.constant 3 : index
    %c0_3 = arith.constant 0 : index
    %3 = vector.load %arg5[%c3, %c0_3] : memref<4x128xf32, #tpu.memory_space<vmem>>, vector<1x128xf32>
    %c0_4 = arith.constant 0 : index
    %c0_5 = arith.constant 0 : index
    %4 = vector.load %arg1[%c0_4, %c0_5] : memref<8x16xbf16, #tpu.memory_space<vmem>>, vector<8x16xbf16>
    %c0_6 = arith.constant 0 : index
    %c0_7 = arith.constant 0 : index
    %5 = vector.load %arg3[%c0_6, %c0_7] : memref<16x128xbf16, #tpu.memory_space<vmem>>, vector<16x128xbf16>
    %cst = arith.constant dense<0.000000e+00> : vector<8x128xf32>
    %6 = tpu.matmul %4, %5, %cst {dimension_numbers = #tpu.dot_dimension_numbers<[1], [0], [0], [1], [0, 0, 1, 1], [], []>} : vector<8x16xbf16>, vector<16x128xbf16>, vector<8x128xf32> -> vector<8x128xf32>
    %7 = vector.broadcast %2 : vector<1x128xf32> to vector<8x128xf32>
    %8 = arith.addf %6, %7 : vector<8x128xf32>
    %9 = math.tanh %8 : vector<8x128xf32>
    %10 = vector.broadcast %0 : vector<1x128xf32> to vector<8x128xf32>
    %11 = arith.mulf %10, %9 : vector<8x128xf32>
    %c0_8 = arith.constant 0 : index
    %c0_9 = arith.constant 0 : index
    %12 = vector.load %arg2[%c0_8, %c0_9] : memref<8x128xbf16, #tpu.memory_space<vmem>>, vector<8x128xbf16>
    %13 = arith.extf %12 : vector<8x128xbf16> to vector<8x128xf32>
    %14 = vector.broadcast %1 : vector<1x128xf32> to vector<8x128xf32>
    %15 = arith.mulf %14, %13 : vector<8x128xf32>
    %16 = arith.addf %11, %15 : vector<8x128xf32>
    %17 = arith.truncf %16 : vector<8x128xf32> to vector<8x128xbf16>
    %c0_10 = arith.constant 0 : index
    %c0_11 = arith.constant 0 : index
    %18 = vector.load %arg4[%c0_10, %c0_11] : memref<128x128xbf16, #tpu.memory_space<vmem>>, vector<128x128xbf16>
    %cst_12 = arith.constant dense<0.000000e+00> : vector<8x128xf32>
    %19 = tpu.matmul %17, %18, %cst_12 {dimension_numbers = #tpu.dot_dimension_numbers<[1], [0], [0], [1], [0, 0, 1, 1], [], []>} : vector<8x128xbf16>, vector<128x128xbf16>, vector<8x128xf32> -> vector<8x128xf32>
    %20 = vector.broadcast %3 : vector<1x128xf32> to vector<8x128xf32>
    %21 = arith.addf %19, %20 : vector<8x128xf32>
    %c0_13 = arith.constant 0 : index
    %c0_14 = arith.constant 0 : index
    %22 = vector.load %arg6[%c0_13, %c0_14] : memref<8x128xf32, #tpu.memory_space<vmem>>, vector<8x128xf32>
    tpu.vector_store %arg6[%c0_13, %c0_14], %21 {strides = array<i32>} : memref<8x128xf32, #tpu.memory_space<vmem>>, vector<8x128xf32>,
    return
  }
  func.func @transform_0(%arg0: i32) -> (i32, i32) {
    %c0_i32 = arith.constant 0 : i32
    %c0_i32_0 = arith.constant 0 : i32
    return %arg0, %c0_i32 : i32, i32
  }
  func.func @transform_1(%arg0: i32) -> (i32, i32) {
    %c0_i32 = arith.constant 0 : i32
    %c0_i32_0 = arith.constant 0 : i32
    return %arg0, %c0_i32 : i32, i32
  }
  func.func @transform_2(%arg0: i32) -> (i32, i32) {
    %c0_i32 = arith.constant 0 : i32
    %c0_i32_0 = arith.constant 0 : i32
    %c0_i32_1 = arith.constant 0 : i32
    return %c0_i32, %c0_i32_0 : i32, i32
  }
  func.func @transform_3(%arg0: i32) -> (i32, i32) {
    %c0_i32 = arith.constant 0 : i32
    %c0_i32_0 = arith.constant 0 : i32
    %c0_i32_1 = arith.constant 0 : i32
    return %c0_i32, %c0_i32_0 : i32, i32
  }
  func.func @transform_4(%arg0: i32) -> (i32, i32) {
    %c0_i32 = arith.constant 0 : i32
    %c0_i32_0 = arith.constant 0 : i32
    %c0_i32_1 = arith.constant 0 : i32
    return %c0_i32, %c0_i32_0 : i32, i32
  }
  func.func @transform_5(%arg0: i32) -> (i32, i32) {
    %c0_i32 = arith.constant 0 : i32
    %c0_i32_0 = arith.constant 0 : i32
    return %arg0, %c0_i32 : i32, i32
  }
}

</mosaic_0001>

<llo_original>
// kernel: tpu_custom_call.1
$region0: #{tpu_custom_call.1}
  #allocation0 [shape = 'u32[]', space=smem, size = 0x4, offset = 0x4, fixed_abs, tag = 'smem constant byte address 0x4 - core index']
  #allocation1 [shape = 'u32[144,128]{1,0:T(1,128)}', space=vmem, size = 0x12000, scoped, tag = 'internal scratch']
  %s0 = inlined_call_operand.hbm [shape: bf16[8,16], index: 0, kind: input, shape index: {}]
  %s1 = inlined_call_operand.hbm [shape: bf16[8,128], index: 1, kind: input, shape index: {}]
  %s2 = inlined_call_operand.hbm [shape: bf16[16,128], index: 2, kind: input, shape index: {}]
  %s3 = inlined_call_operand.hbm [shape: bf16[128,128], index: 3, kind: input, shape index: {}]
  %s4 = inlined_call_operand.vmem [shape: f32[4,128], index: 4, kind: input, shape index: {}]
  %s5 = inlined_call_operand.hbm [shape: f32[8,128], index: 5, kind: output, shape index: {}]
  %s6 = sld [smem:[#allocation0]]
  $region46: #{tpu_custom_call.1} parent=0
    _
  %s8 = ssub.s32 1, %s6
  %s9 = scalar_select 0, %s8, %s6
  $region1: #{tpu_custom_call.1} parent=0
    #allocation2 [shape = 'u8[2048]{0}', space=vmem, size = 0x800, scoped, tag = 'input window, operand 0, single buffered']
    #allocation3 [shape = 's32[1]{0}', space=sflag, size = 0x4, scoped, tag = 'scoped memory for tpu_custom_call.1']
    #allocation4 [shape = 's32[1]{0}', space=sflag, size = 0x4, scoped, tag = 'scoped memory for tpu_custom_call.1']
    #allocation5 [shape = 'u8[2048]{0}', space=vmem, size = 0x800, scoped, tag = 'input window, operand 1, single buffered']
    #allocation6 [shape = 's32[1]{0}', space=sflag, size = 0x4, scoped, tag = 'scoped memory for tpu_custom_call.1']
    #allocation7 [shape = 'u8[4096]{0}', space=vmem, size = 0x1000, scoped, tag = 'input window, operand 2, single buffered']
    #allocation8 [shape = 'u8[32768]{0}', space=vmem, size = 0x8000, scoped, tag = 'input window, operand 3, single buffered']
    #allocation9 [shape = 's32[1]{0}', space=sflag, size = 0x4, scoped, tag = 'scoped memory for tpu_custom_call.1']
    #allocation10 [shape = 'u8[4096]{0}', space=vmem, size = 0x1000, scoped, tag = 'output window, operand 0, single buffered']
    %10 = vsyncpa [#allocation3], 0
    %11 = vsyncpa [#allocation6], 0
    %12 = vsyncpa [#allocation9], 0
    %13 = vsyncpa [#allocation4], 0
    // Predicated region
    $region2: #{tpu_custom_call.1} parent=1 // pred_check
      _
    $region3: #{tpu_custom_call.1} parent=1 // pred_check_branch
      %15 = sbr.rel (0) target = $region5
    $region4: #{tpu_custom_call.1} parent=1 // pred_region
      %s17 = ssub.s32 64, 64
      %18 = vsyncadd [#allocation3], %s17
      %s20 = sshll.u32 [#allocation2], 4
      %s21 = int_to_ptr.vmem [resolvable:$true] %s20
      %23 = dma.hbm_to_vmem [thread:$0]  %s0, 64, %s21, [#allocation3]
    $region5: #{tpu_custom_call.1} parent=1 // pred_fallthru
      _
    // Predicated region
    $region6: #{tpu_custom_call.1} parent=1 // pred_check
      _
    $region7: #{tpu_custom_call.1} parent=1 // pred_check_branch
      %25 = sbr.rel (0) target = $region9
    $region8: #{tpu_custom_call.1} parent=1 // pred_region
      %s27 = ssub.s32 64, 64
      %28 = vsyncadd [#allocation6], %s27
      %s30 = sshll.u32 [#allocation5], 4
      %s31 = int_to_ptr.vmem [resolvable:$true] %s30
      %33 = dma.hbm_to_vmem [thread:$0]  %s1, 64, %s31, [#allocation6]
    $region9: #{tpu_custom_call.1} parent=1 // pred_fallthru
      _
    // Predicated region
    $region10: #{tpu_custom_call.1} parent=1 // pred_check
      _
    $region11: #{tpu_custom_call.1} parent=1 // pred_check_branch
      %35 = sbr.rel (0) target = $region13
    $region12: #{tpu_custom_call.1} parent=1 // pred_region
      %s37 = ssub.s32 128, 128
      %38 = vsyncadd [#allocation6], %s37
      %s39 = sshll.u32 [#allocation7], 4
      %s40 = int_to_ptr.vmem [resolvable:$true] %s39
      %45 = dma.hbm_to_vmem [thread:$0]  %s2, 128, %s40, [#allocation6], 64, 64, 4
    $region13: #{tpu_custom_call.1} parent=1 // pred_fallthru
      _
    // Predicated region
    $region14: #{tpu_custom_call.1} parent=1 // pred_check
      _
    $region15: #{tpu_custom_call.1} parent=1 // pred_check_branch
      %47 = sbr.rel (0) target = $region17
    $region16: #{tpu_custom_call.1} parent=1 // pred_region
      %s49 = ssub.s32 1024, 1024
      %50 = vsyncadd [#allocation9], %s49
      %s51 = sshll.u32 [#allocation8], 4
      %s52 = int_to_ptr.vmem [resolvable:$true] %s51
      %57 = dma.hbm_to_vmem [thread:$0]  %s3, 1024, %s52, [#allocation9], 64, 64, 4
    $region17: #{tpu_custom_call.1} parent=1 // pred_fallthru
      _
    // Predicated region
    $region18: #{tpu_custom_call.1} parent=1 // pred_check
      _
    $region19: #{tpu_custom_call.1} parent=1 // pred_check_branch
      %59 = sbr.rel (0) target = $region21
    $region20: #{tpu_custom_call.1} parent=1 // pred_region
      _
    $region21: #{tpu_custom_call.1} parent=1 // pred_fallthru
      _
    // Predicated region
    $region22: #{tpu_custom_call.1} parent=1 // pred_check
      _
    $region23: #{tpu_custom_call.1} parent=1 // pred_check_branch
      %61 = sbr.rel (0) target = $region25
    $region24: #{tpu_custom_call.1} parent=1 // pred_region
      %62 = dma.done [#allocation3], 64
    $region25: #{tpu_custom_call.1} parent=1 // pred_fallthru
      _
    // Predicated region
    $region26: #{tpu_custom_call.1} parent=1 // pred_check
      _
    $region27: #{tpu_custom_call.1} parent=1 // pred_check_branch
      %64 = sbr.rel (0) target = $region29
    $region28: #{tpu_custom_call.1} parent=1 // pred_region
      %65 = dma.done [#allocation6], 64
    $region29: #{tpu_custom_call.1} parent=1 // pred_fallthru
      _
    // Predicated region
    $region30: #{tpu_custom_call.1} parent=1 // pred_check
      _
    $region31: #{tpu_custom_call.1} parent=1 // pred_check_branch
      %67 = sbr.rel (0) target = $region33
    $region32: #{tpu_custom_call.1} parent=1 // pred_region
      %68 = dma.done [#allocation6], 128
    $region33: #{tpu_custom_call.1} parent=1 // pred_fallthru
      _
    // Predicated region
    $region34: #{tpu_custom_call.1} parent=1 // pred_check
      _
    $region35: #{tpu_custom_call.1} parent=1 // pred_check_branch
      %70 = sbr.rel (0) target = $region37
    $region36: #{tpu_custom_call.1} parent=1 // pred_region
      %71 = dma.done [#allocation9], 1024
    $region37: #{tpu_custom_call.1} parent=1 // pred_fallthru
      _
    %v73 = vld [vmem:[%s4] sm:$0x1]
    %v74 = vld [vmem:[%s4 + $0x1] sm:$0x1]
    %v75 = vld [vmem:[%s4 + $0x2] sm:$0x1]
    %v76 = vld [vmem:[%s4 + $0x3] sm:$0x1]
    %v77 = vld [vmem:[#allocation2] sm:$0xf]
    %v78 = vld [vmem:[#allocation7] sm:$0xf]
    %v79 = vld [vmem:[#allocation7 + $0x4] sm:$0xf]
    %v80 = vlaneseq
    %v81 = vshrl.u32 %v80, 7
    %v82 = vsub.s32 0, %v81
    %v83 = vrot.slane %v75, %v82
    %v86 = vunpack.c.l.b16 %v78
    %v87 = vunpack.c.l.b16 %v79
    %v88 = vpack.c.b16 %v87, %v86
    %vm90 = vcmask 130048
    %v92 = vsel %vm90, %v77, 0
    %94 = vmatprep.subr.bf16.mxu0 0
    %95 = vmatpush1.bf16.msra.mxu0 %v88
    %96 = vmatprep.subr.bf16.mxu0 0
    %97 = vmatpush1.bf16.msra.mxu0 0
    %98 = vmatprep.subr.bf16.mxu0 0
    %99 = vmatpush1.bf16.msra.mxu0 0
    %100 = vmatprep.subr.bf16.mxu0 0
    %101 = vmatpush1.bf16.msra.mxu0 0
    %102 = vmatprep.subr.bf16.mxu0 0
    %103 = vmatpush1.bf16.msra.mxu0 0
    %104 = vmatprep.subr.bf16.mxu0 0
    %105 = vmatpush1.bf16.msra.mxu0 0
    %106 = vmatprep.subr.bf16.mxu0 0
    %107 = vmatpush1.bf16.msra.mxu0 0
    %108 = vmatprep.subr.bf16.mxu0 0
    %109 = vmatpush1.bf16.msra.mxu0 0
    %110 = vmatprep.subr.bf16.mxu0 0
    %111 = vmatpush1.bf16.msra.mxu0 0
    %112 = vmatprep.subr.bf16.mxu0 0
    %113 = vmatpush1.bf16.msra.mxu0 0
    %114 = vmatprep.subr.bf16.mxu0 0
    %115 = vmatpush1.bf16.msra.mxu0 0
    %116 = vmatprep.subr.bf16.mxu0 0
    %117 = vmatpush1.bf16.msra.mxu0 0
    %118 = vmatprep.subr.bf16.mxu0 0
    %119 = vmatpush1.bf16.msra.mxu0 0
    %120 = vmatprep.subr.bf16.mxu0 0
    %121 = vmatpush1.bf16.msra.mxu0 0
    %122 = vmatprep.subr.bf16.mxu0 0
    %123 = vmatpush1.bf16.msra.mxu0 0
    %124 = vmatprep.subr.bf16.mxu0 0
    %125 = vmatpush1.bf16.msra.mxu0 0
    %126 = vmatprep.mubr.bf16.mxu0 0
    %127 = vmatmul.mubr.bf16.gmra.mrb[0].mxu0 %v92
    %v128 = vpop.f32.mrb[0].mxu0
    %v129 = vadd.f32 %v83, %v128
    %v130 = vpop.f32.mrb[0].mxu0
    %v131 = vpop.f32.mrb[0].mxu0
    %v132 = vpop.f32.mrb[0].mxu0
    %133 = vdwg.mxu0
    %v134 = vtanh.pop %v129
    %v135 = vlaneseq
    %v136 = vshrl.u32 %v135, 7
    %v137 = vsub.s32 0, %v136
    %v138 = vrot.slane %v73, %v137
    %v139 = vmul.f32 %v138, %v134
    %v140 = vld [vmem:[#allocation5] sm:$0xf]
    %v141 = vunpack.c.l.bf16 %v140
    %v142 = vlaneseq
    %v143 = vshrl.u32 %v142, 7
    %v144 = vsub.s32 0, %v143
    %v145 = vrot.slane %v74, %v144
    %v146 = vmul.f32 %v145, %v141
    %v147 = vadd.f32 %v139, %v146
    %v148 = vpack.c.bf16 %v147, %v147
    %v149 = vld [vmem:[#allocation8] sm:$0xf]
    %v150 = vld [vmem:[#allocation8 + $0x4] sm:$0xf]
    %v151 = vld [vmem:[#allocation8 + $0x8] sm:$0xf]
    %v152 = vld [vmem:[#allocation8 + $0xc] sm:$0xf]
    %v153 = vld [vmem:[#allocation8 + $0x10] sm:$0xf]
    %v154 = vld [vmem:[#allocation8 + $0x14] sm:$0xf]
    %v155 = vld [vmem:[#allocation8 + $0x18] sm:$0xf]
    %v156 = vld [vmem:[#allocation8 + $0x1c] sm:$0xf]
    %v157 = vld [vmem:[#allocation8 + $0x20] sm:$0xf]
    %v158 = vld [vmem:[#allocation8 + $0x24] sm:$0xf]
    %v159 = vld [vmem:[#allocation8 + $0x28] sm:$0xf]
    %v160 = vld [vmem:[#allocation8 + $0x2c] sm:$0xf]
    %v161 = vld [vmem:[#allocation8 + $0x30] sm:$0xf]
    %v162 = vld [vmem:[#allocation8 + $0x34] sm:$0xf]
    %v163 = vld [vmem:[#allocation8 + $0x38] sm:$0xf]
    %v164 = vld [vmem:[#allocation8 + $0x3c] sm:$0xf]
    %v165 = vlaneseq
    %v166 = vshrl.u32 %v165, 7
    %v167 = vsub.s32 0, %v166
    %v168 = vrot.slane %v76, %v167
    %v185 = vunpack.c.l.b16 %v149
    %v186 = vunpack.c.l.b16 %v150
    %v187 = vunpack.c.l.b16 %v151
    %v188 = vunpack.c.l.b16 %v152
    %v189 = vunpack.c.l.b16 %v153
    %v190 = vunpack.c.l.b16 %v154
    %v191 = vunpack.c.l.b16 %v155
    %v192 = vunpack.c.l.b16 %v156
    %v193 = vunpack.c.l.b16 %v157
    %v194 = vunpack.c.l.b16 %v158
    %v195 = vunpack.c.l.b16 %v159
    %v196 = vunpack.c.l.b16 %v160
    %v197 = vunpack.c.l.b16 %v161
    %v198 = vunpack.c.l.b16 %v162
    %v199 = vunpack.c.l.b16 %v163
    %v200 = vunpack.c.l.b16 %v164
    %v201 = vpack.c.b16 %v186, %v185
    %v202 = vpack.c.b16 %v188, %v187
    %v203 = vpack.c.b16 %v190, %v189
    %v204 = vpack.c.b16 %v192, %v191
    %v205 = vpack.c.b16 %v194, %v193
    %v206 = vpack.c.b16 %v196, %v195
    %v207 = vpack.c.b16 %v198, %v197
    %v208 = vpack.c.b16 %v200, %v199
    %217 = vmatprep.subr.bf16.mxu0 0
    %218 = vmatpush1.bf16.msra.mxu0 %v201
    %219 = vmatprep.subr.bf16.mxu0 0
    %220 = vmatpush1.bf16.msra.mxu0 %v202
    %221 = vmatprep.subr.bf16.mxu0 0
    %222 = vmatpush1.bf16.msra.mxu0 %v203
    %223 = vmatprep.subr.bf16.mxu0 0
    %224 = vmatpush1.bf16.msra.mxu0 %v204
    %225 = vmatprep.subr.bf16.mxu0 0
    %226 = vmatpush1.bf16.msra.mxu0 %v205
    %227 = vmatprep.subr.bf16.mxu0 0
    %228 = vmatpush1.bf16.msra.mxu0 %v206
    %229 = vmatprep.subr.bf16.mxu0 0
    %230 = vmatpush1.bf16.msra.mxu0 %v207
    %231 = vmatprep.subr.bf16.mxu0 0
    %232 = vmatpush1.bf16.msra.mxu0 %v208
    %233 = vmatprep.subr.bf16.mxu0 0
    %234 = vmatpush1.bf16.msra.mxu0 0
    %235 = vmatprep.subr.bf16.mxu0 0
    %236 = vmatpush1.bf16.msra.mxu0 0
    %237 = vmatprep.subr.bf16.mxu0 0
    %238 = vmatpush1.bf16.msra.mxu0 0
    %239 = vmatprep.subr.bf16.mxu0 0
    %240 = vmatpush1.bf16.msra.mxu0 0
    %241 = vmatprep.subr.bf16.mxu0 0
    %242 = vmatpush1.bf16.msra.mxu0 0
    %243 = vmatprep.subr.bf16.mxu0 0
    %244 = vmatpush1.bf16.msra.mxu0 0
    %245 = vmatprep.subr.bf16.mxu0 0
    %246 = vmatpush1.bf16.msra.mxu0 0
    %247 = vmatprep.subr.bf16.mxu0 0
    %248 = vmatpush1.bf16.msra.mxu0 0
    %249 = vmatprep.mubr.bf16.mxu0 0
    %250 = vmatmul.mubr.bf16.gmra.mrb[0].mxu0 %v148
    %v251 = vpop.f32.mrb[0].mxu0
    %v252 = vadd.f32 %v168, %v251
    %v253 = vpop.f32.mrb[0].mxu0
    %v254 = vpop.f32.mrb[0].mxu0
    %v255 = vpop.f32.mrb[0].mxu0
    %256 = vdwg.mxu0
    %257 = vst [vmem:[#allocation10] sm:$0xff] %v252
    // Predicated region
    $region38: #{tpu_custom_call.1} parent=1 // pred_check
      _
    $region39: #{tpu_custom_call.1} parent=1 // pred_check_branch
      %259 = sbr.rel (0) target = $region41
    $region40: #{tpu_custom_call.1} parent=1 // pred_region
      %s261 = ssub.s32 128, 128
      %262 = vsyncadd [#allocation4], %s261
      %s264 = sshll.u32 [#allocation10], 4
      %s265 = int_to_ptr.vmem [resolvable:$true] %s264
      %267 = dma.vmem_to_hbm [thread:$0]  %s265, 128, %s5, [#allocation4]
    $region41: #{tpu_custom_call.1} parent=1 // pred_fallthru
      _
    // Predicated region
    $region42: #{tpu_custom_call.1} parent=1 // pred_check
      _
    $region43: #{tpu_custom_call.1} parent=1 // pred_check_branch
      %269 = sbr.rel (0) target = $region45
    $region44: #{tpu_custom_call.1} parent=1 // pred_region
      %270 = dma.done [#allocation4], 128
    $region45: #{tpu_custom_call.1} parent=1 // pred_fallthru
      _
    %271 = vsyncpa [#allocation3], 1
    %272 = vsyncpa [#allocation6], 1
    %273 = vsyncpa [#allocation9], 1
    %274 = vsyncpa [#allocation4], 1

</llo_original>
